<compile_context>
chip_gen: v7x
topology: tpu7x:2x2x1
jax: 0.10.0
libtpu: 0.0.40
codegen_flags: <defaults>
</compile_context>

<pallas_src>
import functools

import jax
import jax.numpy as jnp
import numpy as np
from jax.experimental import pallas as pl
from jax.experimental.pallas import tpu as pltpu


def _round_up(x, m):
    return (x + m - 1) // m * m


def _attn_decoder_kernel(H, L, V, r2, tok_ref, emb_ref, hid_ref, enc_ref,
                         slab_ref, out_ref):
    f32 = jnp.float32
    del tok_ref  # embedding row is already selected by the BlockSpec index_map

    emb = emb_ref[0]                       # (1, H)  == embedded[0] (dropout = id)
    h = hid_ref[...]                       # (1, H)  == hidden[0]

    # ---- fused "everything that consumes (emb | h)" matmul ------------------
    # slab rows 0:2H  = [[w_ae, w_ce, 0              ],
    #                    [w_ah, 0,    w_hr|w_hz|w_hn ]]          (2H, L+4H)
    # slab row  2H    = [b_a | b_c | b_hr | b_hz | b_hn]
    eh = jnp.concatenate([emb, h], axis=1)                         # (1, 2H)
    W1 = slab_ref[0:2 * H, 0:L + 4 * H]
    B1 = slab_ref[2 * H:2 * H + 1, 0:L + 4 * H]
    y1 = jnp.dot(eh, W1, preferred_element_type=f32) + B1          # (1, L+4H)

    # ---- attention softmax over max_length ----------------------------------
    attn_logits = y1[:, 0:L]                         # emb@w_ae + h@w_ah + b_a
    m = jnp.max(attn_logits, axis=1, keepdims=True)
    e = jnp.exp(attn_logits - m)
    denom = jnp.sum(e, axis=1, keepdims=True)
    aw = e * pl.reciprocal(denom, approx=True)                     # (1, L)

    attn_applied = jnp.dot(aw, enc_ref[...], preferred_element_type=f32)   # (1, H)

    # ---- attn_combine (emb part + b_c already inside y1), then ReLU ---------
    w_ca = slab_ref[r2:r2 + H, 0:H]
    comb = y1[:, L:L + H] + jnp.dot(attn_applied, w_ca, preferred_element_type=f32)
    x = jnp.maximum(comb, 0.0)                                     # (1, H)

    # ---- single-step GRU: fused input-gate matmul + fused hidden terms ------
    W_x = slab_ref[r2:r2 + H, H:4 * H]                             # [w_ir|w_iz|w_in]
    B_x = slab_ref[r2 + H:r2 + H + 1, H:4 * H]                     # [b_ir|b_iz|b_in]
    y2 = jnp.dot(x, W_x, preferred_element_type=f32) + B_x         # (1, 3H)

    rh = y1[:, L + H:L + 2 * H]            # h @ w_hr + b_hr
    zh = y1[:, L + 2 * H:L + 3 * H]        # h @ w_hz + b_hz
    nh = y1[:, L + 3 * H:L + 4 * H]        # h @ w_hn + b_hn
    r = jax.nn.sigmoid(y2[:, 0:H] + rh)
    z = jax.nn.sigmoid(y2[:, H:2 * H] + zh)
    n = jnp.tanh(y2[:, 2 * H:3 * H] + r * nh)
    h_new = (1.0 - z) * n + z * h                                  # (1, H)

    # ---- output projection + log_softmax -------------------------------------
    w_out = slab_ref[r2:r2 + H, 4 * H:4 * H + V]
    b_out = slab_ref[r2 + H:r2 + H + 1, 4 * H:4 * H + V]
    logits = jnp.dot(h_new, w_out, preferred_element_type=f32) + b_out     # (1, V)
    m2 = jnp.max(logits, axis=1, keepdims=True)
    lse = jnp.log(jnp.sum(jnp.exp(logits - m2), axis=1, keepdims=True)) + m2
    logp = logits - lse

    # ---- single lane-dense packed store: [logp | h_new | pad | aw] -----------
    aw_off = _round_up(V + H, 128)
    parts = [logp, h_new]
    pad_w = aw_off - (V + H)
    if pad_w:
        parts.append(jnp.zeros((1, pad_w), f32))
    parts.append(aw)
    out_ref[...] = jnp.concatenate(parts, axis=1)


def pack_params(p, H, L, V):
    """Host-side packing of the 23 PyTorch-style parameters into ONE slab + emb.

    Slab layout (all row starts 8-aligned in sublanes):
      rows 0:2H      -> [[w_ae, w_ce, 0], [w_ah, 0, w_hr|w_hz|w_hn]]   width L+4H
      row  2H        -> [b_a | b_c | b_hr | b_hz | b_hn]
      rows r2:r2+H   -> [w_ca | w_ir | w_iz | w_in | w_out]            width 4H+V
      row  r2+H      -> [0    | b_ir | b_iz | b_in | b_out]
    """
    f32 = jnp.float32
    w1_w = L + 4 * H
    w2_w = 4 * H + V
    slab_w = max(w1_w, w2_w)
    r2 = _round_up(2 * H + 1, 8)           # 8-aligned sublane start of part 2
    rows = r2 + H + 1

    w_h_gru = jnp.concatenate([p["w_hr"], p["w_hz"], p["w_hn"]], axis=1)       # (H, 3H)
    row_emb = jnp.concatenate([p["w_ae"], p["w_ce"],
                               jnp.zeros((H, 3 * H), f32)], axis=1)            # (H, L+4H)
    row_hid = jnp.concatenate([p["w_ah"], jnp.zeros((H, H), f32),
                               w_h_gru], axis=1)                               # (H, L+4H)
    b1 = jnp.concatenate([p["b_a"], p["b_c"], p["b_hr"], p["b_hz"], p["b_hn"]],
                         axis=1)                                               # (1, L+4H)

    w2 = jnp.concatenate([p["w_ca"], p["w_ir"], p["w_iz"], p["w_in"],
                          p["w_out"]], axis=1)                                 # (H, 4H+V)
    b2 = jnp.concatenate([jnp.zeros((1, H), f32), p["b_ir"], p["b_iz"],
                          p["b_in"], p["b_out"]], axis=1)                      # (1, 4H+V)

    slab = jnp.zeros((rows, slab_w), f32)
    slab = slab.at[0:2 * H, 0:w1_w].set(jnp.concatenate([row_emb, row_hid], axis=0))
    slab = slab.at[2 * H:2 * H + 1, 0:w1_w].set(b1)
    slab = slab.at[r2:r2 + H, 0:w2_w].set(w2)
    slab = slab.at[r2 + H:r2 + H + 1, 0:w2_w].set(b2)

    emb3d = p["emb"].reshape(V, 1, H)   # (V,1,H) so the (1,1,H) block matches last-2 dims
    return emb3d, slab, r2


def attn_decoder_forward(token, hidden, encoder_outputs, params):
    """token: () int32; hidden: (1,1,H) f32; encoder_outputs: (L,H) f32."""
    H = hidden.shape[-1]
    L = encoder_outputs.shape[0]
    V = params["w_out"].shape[1]
    aw_off = _round_up(V + H, 128)
    outw = aw_off + L

    emb3d, slab, r2 = pack_params(params, H, L, V)

    tok = jnp.reshape(token, (1,)).astype(jnp.int32)
    hid2d = jnp.reshape(hidden, (1, H)).astype(jnp.float32)
    enc = encoder_outputs.astype(jnp.float32)

    kernel = functools.partial(_attn_decoder_kernel, H, L, V, r2)

    grid_spec = pltpu.PrefetchScalarGridSpec(
        num_scalar_prefetch=1,
        grid=(1,),
        in_specs=[
            # embedding row gathered via the scalar-prefetched token
            pl.BlockSpec((1, 1, H), lambda i, tok_ref: (tok_ref[0], 0, 0)),
            pl.BlockSpec((1, H), lambda i, tok_ref: (0, 0)),       # hidden
            pl.BlockSpec((L, H), lambda i, tok_ref: (0, 0)),       # encoder outputs
            pl.BlockSpec(slab.shape, lambda i, tok_ref: (0, 0)),   # fused weight slab
        ],
        out_specs=pl.BlockSpec((1, outw), lambda i, tok_ref: (0, 0)),
    )

    packed = pl.pallas_call(
        kernel,
        grid_spec=grid_spec,
        out_shape=jax.ShapeDtypeStruct((1, outw), jnp.float32),
        compiler_params=pltpu.CompilerParams(
            dimension_semantics=("arbitrary",)),
    )(tok, emb3d, hid2d, enc, slab)

    logp = packed[:, 0:V]
    new_hidden = packed[:, V:V + H].reshape(1, 1, H)
    aw = packed[:, aw_off:aw_off + L]
    return logp, new_hidden, aw


def init_params(key, hidden_size, output_size, max_length):
    """Deterministic synthetic parameters (Linear weights stored as (in, out))."""
    H, V, L = hidden_size, output_size, max_length
    keys = jax.random.split(key, 24)
    k = iter(keys)

    def w(kk, shape, scale=0.1):
        return (scale * jax.random.normal(kk, shape)).astype(jnp.float32)

    p = {}
    p["emb"] = w(next(k), (V, H), 1.0)
    # attn: Linear(2H -> L), split along input axis: [embedded | hidden]
    p["w_ae"] = w(next(k), (H, L)); p["w_ah"] = w(next(k), (H, L))
    p["b_a"] = w(next(k), (1, L))
    # attn_combine: Linear(2H -> H), split: [embedded | attn_applied]
    p["w_ce"] = w(next(k), (H, H)); p["w_ca"] = w(next(k), (H, H))
    p["b_c"] = w(next(k), (1, H))
    # GRU cell weights (r, z, n gates), stored as (in, out) = (H, H)
    for name in ("w_ir", "w_iz", "w_in", "w_hr", "w_hz", "w_hn"):
        p[name] = w(next(k), (H, H))
    for name in ("b_ir", "b_iz", "b_in", "b_hr", "b_hz", "b_hn"):
        p[name] = w(next(k), (1, H))
    # output projection
    p["w_out"] = w(next(k), (H, V))
    p["b_out"] = w(next(k), (1, V))
    return p


def reference_forward(token, hidden, encoder_outputs, p):
    """Pure-JAX reference mirroring the PyTorch forward (dropout = identity)."""
    emb = p["emb"][token][None, :]              # (1, H)
    h = hidden[0]                               # (1, H)
    logits = emb @ p["w_ae"] + h @ p["w_ah"] + p["b_a"]
    aw = jax.nn.softmax(logits, axis=1)
    attn_applied = aw @ encoder_outputs
    x = jax.nn.relu(emb @ p["w_ce"] + attn_applied @ p["w_ca"] + p["b_c"])
    r = jax.nn.sigmoid(x @ p["w_ir"] + p["b_ir"] + h @ p["w_hr"] + p["b_hr"])
    z = jax.nn.sigmoid(x @ p["w_iz"] + p["b_iz"] + h @ p["w_hz"] + p["b_hz"])
    n = jnp.tanh(x @ p["w_in"] + p["b_in"] + r * (h @ p["w_hn"] + p["b_hn"]))
    h_new = (1.0 - z) * n + z * h
    out = jax.nn.log_softmax(h_new @ p["w_out"] + p["b_out"], axis=1)
    return out, h_new[None], aw


if __name__ == "__main__":
    HIDDEN = 32       # hidden_size
    VOCAB = 64        # output_size
    MAXLEN = 128      # max_length (lane-aligned)

    key = jax.random.PRNGKey(0)
    kp, kh, ke, kt = jax.random.split(key, 4)

    params = init_params(kp, HIDDEN, VOCAB, MAXLEN)
    token = jax.random.randint(kt, (), 0, VOCAB, dtype=jnp.int32)      # input_
    hidden = (0.1 * jax.random.normal(kh, (1, 1, HIDDEN))).astype(jnp.float32)
    encoder_outputs = jax.random.normal(ke, (MAXLEN, HIDDEN)).astype(jnp.float32)

    logp, new_hidden, attn_w = attn_decoder_forward(
        token, hidden, encoder_outputs, params)
    jax.block_until_ready((logp, new_hidden, attn_w))

    ref_logp, ref_hidden, ref_aw = reference_forward(
        int(token), hidden, encoder_outputs, params)

    np.testing.assert_allclose(np.asarray(logp), np.asarray(ref_logp),
                               atol=2e-3, rtol=2e-3)
    np.testing.assert_allclose(np.asarray(new_hidden), np.asarray(ref_hidden),
                               atol=2e-3, rtol=2e-3)
    np.testing.assert_allclose(np.asarray(attn_w), np.asarray(ref_aw),
                               atol=2e-3, rtol=2e-3)

    assert logp.shape == (1, VOCAB)
    assert new_hidden.shape == (1, 1, HIDDEN)
    assert attn_w.shape == (1, MAXLEN)
    print("KERNEL_OK")
</pallas_src>

<mosaic_0001>
module attributes {stable_mosaic.version = 11 : i64} {
  func.func @_attn_decoder_kernel(%arg0: i32, %arg1: memref<1xi32, #tpu.memory_space<smem>>, %arg2: memref<1x1x32xf32, #tpu.memory_space<vmem>>, %arg3: memref<1x32xf32, #tpu.memory_space<vmem>>, %arg4: memref<128x32xf32, #tpu.memory_space<vmem>>, %arg5: memref<105x256xf32, #tpu.memory_space<vmem>>, %arg6: memref<1x256xf32, #tpu.memory_space<vmem>>) attributes {dimension_semantics = [#tpu.dimension_semantics<arbitrary>], iteration_bounds = array<i64: 1>, scalar_prefetch = 1 : i64, scratch_operands = 0 : i64, tpu.core_type = #tpu.core_type<tc>, window_params = [{transform_indices = @transform_0, window_bounds = array<i64: 1, 1, 32>}, {pipeline_mode = #tpu.pipeline_mode<synchronous>, transform_indices = @transform_1, window_bounds = array<i64: 1, 32>}, {pipeline_mode = #tpu.pipeline_mode<synchronous>, transform_indices = @transform_2, window_bounds = array<i64: 128, 32>}, {pipeline_mode = #tpu.pipeline_mode<synchronous>, transform_indices = @transform_3, window_bounds = array<i64: 105, 256>}, {pipeline_mode = #tpu.pipeline_mode<synchronous>, transform_indices = @transform_4, window_bounds = array<i64: 1, 256>}]} {
    %c0 = arith.constant 0 : index
    %c0_0 = arith.constant 0 : index
    %c0_1 = arith.constant 0 : index
    %0 = vector.load %arg2[%c0, %c0_0, %c0_1] : memref<1x1x32xf32, #tpu.memory_space<vmem>>, vector<1x1x32xf32>
    %1 = vector.shape_cast %0 : vector<1x1x32xf32> to vector<1x32xf32>
    %c0_2 = arith.constant 0 : index
    %c0_3 = arith.constant 0 : index
    %2 = vector.load %arg3[%c0_2, %c0_3] : memref<1x32xf32, #tpu.memory_space<vmem>>, vector<1x32xf32>
    %3 = tpu.concatenate %1, %2 in 1 : vector<1x32xf32>, vector<1x32xf32> -> vector<1x64xf32>
    %c0_4 = arith.constant 0 : index
    %c0_5 = arith.constant 0 : index
    %4 = vector.load %arg5[%c0_4, %c0_5] : memref<105x256xf32, #tpu.memory_space<vmem>>, vector<64x256xf32>
    %c64 = arith.constant 64 : index
    %c0_6 = arith.constant 0 : index
    %5 = vector.load %arg5[%c64, %c0_6] : memref<105x256xf32, #tpu.memory_space<vmem>>, vector<1x256xf32>
    %cst = arith.constant dense<0.000000e+00> : vector<1x256xf32>
    %6 = tpu.matmul %3, %4, %cst {dimension_numbers = #tpu.dot_dimension_numbers<[1], [0], [0], [1], [0, 0, 1, 1], [], []>} : vector<1x64xf32>, vector<64x256xf32>, vector<1x256xf32> -> vector<1x256xf32>
    %7 = arith.addf %6, %5 : vector<1x256xf32>
    %8 = vector.extract_strided_slice %7 {offsets = [0, 0], sizes = [1, 128], strides = [1, 1]} : vector<1x256xf32> to vector<1x128xf32>
    %cst_7 = arith.constant dense<0xFF800000> : vector<1xf32>
    %9 = vector.multi_reduction <maximumf>, %8, %cst_7 [1] : vector<1x128xf32> to vector<1xf32>
    %10 = vector.shape_cast %9 : vector<1xf32> to vector<1x1xf32>
    %11 = vector.broadcast %10 : vector<1x1xf32> to vector<1x128xf32>
    %12 = arith.subf %8, %11 : vector<1x128xf32>
    %13 = math.exp %12 : vector<1x128xf32>
    %cst_8 = arith.constant dense<0.000000e+00> : vector<1xf32>
    %14 = vector.multi_reduction <add>, %13, %cst_8 [1] : vector<1x128xf32> to vector<1xf32>
    %15 = vector.shape_cast %14 : vector<1xf32> to vector<1x1xf32>
    %16 = tpu.reciprocal %15 {approx = true} : vector<1x1xf32> -> vector<1x1xf32>
    %17 = vector.broadcast %16 : vector<1x1xf32> to vector<1x128xf32>
    %18 = arith.mulf %13, %17 : vector<1x128xf32>
    %c0_9 = arith.constant 0 : index
    %c0_10 = arith.constant 0 : index
    %19 = vector.load %arg4[%c0_9, %c0_10] : memref<128x32xf32, #tpu.memory_space<vmem>>, vector<128x32xf32>
    %cst_11 = arith.constant dense<0.000000e+00> : vector<1x32xf32>
    %20 = tpu.matmul %18, %19, %cst_11 {dimension_numbers = #tpu.dot_dimension_numbers<[1], [0], [0], [1], [0, 0, 1, 1], [], []>} : vector<1x128xf32>, vector<128x32xf32>, vector<1x32xf32> -> vector<1x32xf32>
    %c72 = arith.constant 72 : index
    %c0_12 = arith.constant 0 : index
    %21 = vector.load %arg5[%c72, %c0_12] : memref<105x256xf32, #tpu.memory_space<vmem>>, vector<32x32xf32>
    %22 = vector.extract_strided_slice %7 {offsets = [0, 128], sizes = [1, 32], strides = [1, 1]} : vector<1x256xf32> to vector<1x32xf32>
    %cst_13 = arith.constant dense<0.000000e+00> : vector<1x32xf32>
    %23 = tpu.matmul %20, %21, %cst_13 {dimension_numbers = #tpu.dot_dimension_numbers<[1], [0], [0], [1], [0, 0, 1, 1], [], []>} : vector<1x32xf32>, vector<32x32xf32>, vector<1x32xf32> -> vector<1x32xf32>
    %24 = arith.addf %22, %23 : vector<1x32xf32>
    %cst_14 = arith.constant 0.000000e+00 : f32
    %25 = vector.broadcast %cst_14 : f32 to vector<1x32xf32>
    %26 = arith.maximumf %24, %25 : vector<1x32xf32>
    %c72_15 = arith.constant 72 : index
    %c32 = arith.constant 32 : index
    %27 = vector.load %arg5[%c72_15, %c32] : memref<105x256xf32, #tpu.memory_space<vmem>>, vector<32x96xf32>
    %c104 = arith.constant 104 : index
    %c32_16 = arith.constant 32 : index
    %28 = vector.load %arg5[%c104, %c32_16] : memref<105x256xf32, #tpu.memory_space<vmem>>, vector<1x96xf32>
    %cst_17 = arith.constant dense<0.000000e+00> : vector<1x96xf32>
    %29 = tpu.matmul %26, %27, %cst_17 {dimension_numbers = #tpu.dot_dimension_numbers<[1], [0], [0], [1], [0, 0, 1, 1], [], []>} : vector<1x32xf32>, vector<32x96xf32>, vector<1x96xf32> -> vector<1x96xf32>
    %30 = arith.addf %29, %28 : vector<1x96xf32>
    %31 = vector.extract_strided_slice %7 {offsets = [0, 160], sizes = [1, 32], strides = [1, 1]} : vector<1x256xf32> to vector<1x32xf32>
    %32 = vector.extract_strided_slice %7 {offsets = [0, 192], sizes = [1, 32], strides = [1, 1]} : vector<1x256xf32> to vector<1x32xf32>
    %33 = vector.extract_strided_slice %7 {offsets = [0, 224], sizes = [1, 32], strides = [1, 1]} : vector<1x256xf32> to vector<1x32xf32>
    %34 = vector.extract_strided_slice %30 {offsets = [0, 0], sizes = [1, 32], strides = [1, 1]} : vector<1x96xf32> to vector<1x32xf32>
    %35 = arith.addf %34, %31 : vector<1x32xf32>
    %36 = arith.negf %35 : vector<1x32xf32>
    %37 = math.exp %36 : vector<1x32xf32>
    %cst_18 = arith.constant 1.000000e+00 : f32
    %38 = vector.broadcast %cst_18 : f32 to vector<1x32xf32>
    %39 = arith.addf %38, %37 : vector<1x32xf32>
    %40 = arith.divf %38, %39 : vector<1x32xf32>
    %41 = vector.extract_strided_slice %30 {offsets = [0, 32], sizes = [1, 32], strides = [1, 1]} : vector<1x96xf32> to vector<1x32xf32>
    %42 = arith.addf %41, %32 : vector<1x32xf32>
    %43 = arith.negf %42 : vector<1x32xf32>
    %44 = math.exp %43 : vector<1x32xf32>
    %cst_19 = arith.constant 1.000000e+00 : f32
    %45 = vector.broadcast %cst_19 : f32 to vector<1x32xf32>
    %46 = arith.addf %45, %44 : vector<1x32xf32>
    %47 = arith.divf %45, %46 : vector<1x32xf32>
    %48 = vector.extract_strided_slice %30 {offsets = [0, 64], sizes = [1, 32], strides = [1, 1]} : vector<1x96xf32> to vector<1x32xf32>
    %49 = arith.mulf %40, %33 : vector<1x32xf32>
    %50 = arith.addf %48, %49 : vector<1x32xf32>
    %51 = math.tanh %50 : vector<1x32xf32>
    %cst_20 = arith.constant 1.000000e+00 : f32
    %52 = vector.broadcast %cst_20 : f32 to vector<1x32xf32>
    %53 = arith.subf %52, %47 : vector<1x32xf32>
    %54 = arith.mulf %53, %51 : vector<1x32xf32>
    %55 = arith.mulf %47, %2 : vector<1x32xf32>
    %56 = arith.addf %54, %55 : vector<1x32xf32>
    %c72_21 = arith.constant 72 : index
    %c128 = arith.constant 128 : index
    %57 = vector.load %arg5[%c72_21, %c128] : memref<105x256xf32, #tpu.memory_space<vmem>>, vector<32x64xf32>
    %c104_22 = arith.constant 104 : index
    %c128_23 = arith.constant 128 : index
    %58 = vector.load %arg5[%c104_22, %c128_23] : memref<105x256xf32, #tpu.memory_space<vmem>>, vector<1x64xf32>
    %cst_24 = arith.constant dense<0.000000e+00> : vector<1x64xf32>
    %59 = tpu.matmul %56, %57, %cst_24 {dimension_numbers = #tpu.dot_dimension_numbers<[1], [0], [0], [1], [0, 0, 1, 1], [], []>} : vector<1x32xf32>, vector<32x64xf32>, vector<1x64xf32> -> vector<1x64xf32>
    %60 = arith.addf %59, %58 : vector<1x64xf32>
    %cst_25 = arith.constant dense<0xFF800000> : vector<1xf32>
    %61 = vector.multi_reduction <maximumf>, %60, %cst_25 [1] : vector<1x64xf32> to vector<1xf32>
    %62 = vector.shape_cast %61 : vector<1xf32> to vector<1x1xf32>
    %63 = vector.broadcast %62 : vector<1x1xf32> to vector<1x64xf32>
    %64 = arith.subf %60, %63 : vector<1x64xf32>
    %65 = math.exp %64 : vector<1x64xf32>
    %cst_26 = arith.constant dense<0.000000e+00> : vector<1xf32>
    %66 = vector.multi_reduction <add>, %65, %cst_26 [1] : vector<1x64xf32> to vector<1xf32>
    %67 = vector.shape_cast %66 : vector<1xf32> to vector<1x1xf32>
    %68 = math.log %67 : vector<1x1xf32>
    %69 = arith.addf %68, %62 : vector<1x1xf32>
    %70 = vector.broadcast %69 : vector<1x1xf32> to vector<1x64xf32>
    %71 = arith.subf %60, %70 : vector<1x64xf32>
    %cst_27 = arith.constant 0.000000e+00 : f32
    %72 = vector.broadcast %cst_27 : f32 to vector<1x32xf32>
    %73 = tpu.concatenate %71, %56, %72, %18 in 1 : vector<1x64xf32>, vector<1x32xf32>, vector<1x32xf32>, vector<1x128xf32> -> vector<1x256xf32>
    %c0_28 = arith.constant 0 : index
    %c0_29 = arith.constant 0 : index
    %74 = vector.load %arg6[%c0_28, %c0_29] : memref<1x256xf32, #tpu.memory_space<vmem>>, vector<1x256xf32>
    tpu.vector_store %arg6[%c0_28, %c0_29], %73 {strides = array<i32>} : memref<1x256xf32, #tpu.memory_space<vmem>>, vector<1x256xf32>,
    return
  }
  func.func @transform_0(%arg0: i32, %arg1: memref<1xi32, #tpu.memory_space<smem>>) -> (i32, i32, i32) {
    %c0 = arith.constant 0 : index
    %0 = memref.load %arg1[%c0] : memref<1xi32, #tpu.memory_space<smem>>
    %c0_i32 = arith.constant 0 : i32
    %c0_i32_0 = arith.constant 0 : i32
    %c0_i32_1 = arith.constant 0 : i32
    return %0, %c0_i32, %c0_i32_0 : i32, i32, i32
  }
  func.func @transform_1(%arg0: i32, %arg1: memref<1xi32, #tpu.memory_space<smem>>) -> (i32, i32) {
    %c0_i32 = arith.constant 0 : i32
    %c0_i32_0 = arith.constant 0 : i32
    %c0_i32_1 = arith.constant 0 : i32
    return %c0_i32, %c0_i32_0 : i32, i32
  }
  func.func @transform_2(%arg0: i32, %arg1: memref<1xi32, #tpu.memory_space<smem>>) -> (i32, i32) {
    %c0_i32 = arith.constant 0 : i32
    %c0_i32_0 = arith.constant 0 : i32
    %c0_i32_1 = arith.constant 0 : i32
    return %c0_i32, %c0_i32_0 : i32, i32
  }
  func.func @transform_3(%arg0: i32, %arg1: memref<1xi32, #tpu.memory_space<smem>>) -> (i32, i32) {
    %c0_i32 = arith.constant 0 : i32
    %c0_i32_0 = arith.constant 0 : i32
    %c0_i32_1 = arith.constant 0 : i32
    return %c0_i32, %c0_i32_0 : i32, i32
  }
  func.func @transform_4(%arg0: i32, %arg1: memref<1xi32, #tpu.memory_space<smem>>) -> (i32, i32) {
    %c0_i32 = arith.constant 0 : i32
    %c0_i32_0 = arith.constant 0 : i32
    %c0_i32_1 = arith.constant 0 : i32
    return %c0_i32, %c0_i32_0 : i32, i32
  }
}

</mosaic_0001>

<llo_original>
// kernel: tpu_custom_call.1
$region0: #{tpu_custom_call.1}
  #allocation0 [shape = 'u32[]', space=smem, size = 0x4, offset = 0x4, fixed_abs, tag = 'smem constant byte address 0x4 - core index']
  #allocation1 [shape = 'u32[144,128]{1,0:T(1,128)}', space=vmem, size = 0x12000, scoped, tag = 'internal scratch']
  #allocation2 [shape = 's32[1]{0}', space=sflag, size = 0x4, scoped, tag = 'scoped memory for tpu_custom_call.1']
  #allocation3 [shape = 's32[1]{0:T(128)S(6)}', space=smem, size = 0x200, scoped, tag = 'prefetched SMEM operand 0']
  %s0 = inlined_call_operand.<no memory space> [shape: s32[1], index: 0, kind: input, shape index: {}]
  %s1 = inlined_call_operand.vmem [shape: f32[64,1,32], index: 1, kind: input, shape index: {}]
  %s2 = inlined_call_operand.vmem [shape: f32[1,32], index: 2, kind: input, shape index: {}]
  %s3 = inlined_call_operand.vmem [shape: f32[128,32], index: 3, kind: input, shape index: {}]
  %s4 = inlined_call_operand.vmem [shape: f32[105,256], index: 4, kind: input, shape index: {}]
  %s5 = inlined_call_operand.hbm [shape: f32[1,256], index: 5, kind: output, shape index: {}]
  %s6 = sld [smem:[#allocation0]]
  $region26: #{tpu_custom_call.1} parent=0
    _
  %s8 = ssub.s32 1, %s6
  %s9 = scalar_select 0, %s8, %s6
  %10 = sst [smem:[#allocation3]] %s0
  $region1: #{tpu_custom_call.1} parent=0
    #allocation4 [shape = 'u8[1024]{0}', space=vmem, size = 0x400, scoped, tag = 'output window, operand 0, single buffered']
    #allocation5 [shape = 's32[1]{0}', space=sflag, size = 0x4, scoped, tag = 'scoped memory for tpu_custom_call.1']
    %11 = vsyncpa [#allocation5], 0
    // Predicated region
    $region2: #{tpu_custom_call.1} parent=1 // pred_check
      _
    $region3: #{tpu_custom_call.1} parent=1 // pred_check_branch
      %13 = sbr.rel (0) target = $region5
    $region4: #{tpu_custom_call.1} parent=1 // pred_region
      %s14 = sld [smem:[#allocation3]]
      %p15 = scmp.lt.s32.totalorder %s14, 63
      %s16 = scalar_select %p15, %s14, 63
      %s17 = scalar_lea.vmem %s1, %s16
      %s18 = sld [smem:[#allocation3]]
    $region5: #{tpu_custom_call.1} parent=1 // pred_fallthru
      _
    // Predicated region
    $region6: #{tpu_custom_call.1} parent=1 // pred_check
      _
    $region7: #{tpu_custom_call.1} parent=1 // pred_check_branch
      %20 = sbr.rel (0) target = $region9
    $region8: #{tpu_custom_call.1} parent=1 // pred_region
      _
    $region9: #{tpu_custom_call.1} parent=1 // pred_fallthru
      _
    // Predicated region
    $region10: #{tpu_custom_call.1} parent=1 // pred_check
      _
    $region11: #{tpu_custom_call.1} parent=1 // pred_check_branch
      %22 = sbr.rel (0) target = $region13
    $region12: #{tpu_custom_call.1} parent=1 // pred_region
      _
    $region13: #{tpu_custom_call.1} parent=1 // pred_fallthru
      _
    // Predicated region
    $region14: #{tpu_custom_call.1} parent=1 // pred_check
      _
    $region15: #{tpu_custom_call.1} parent=1 // pred_check_branch
      %24 = sbr.rel (0) target = $region17
    $region16: #{tpu_custom_call.1} parent=1 // pred_region
      _
    $region17: #{tpu_custom_call.1} parent=1 // pred_fallthru
      _
    %s25 = sld [smem:[#allocation3]]
    %p26 = scmp.lt.s32.totalorder %s25, 63
    %s27 = scalar_select %p26, %s25, 63
    %s28 = scalar_lea.vmem %s1, %s27
    %s29 = sld [smem:[#allocation3]]
    %p30 = scmp.lt.s32.totalorder %s29, 63
    %s31 = scalar_select %p30, %s29, 63
    %s32 = scalar_lea.vmem %s1, %s31
    %s33 = sld [smem:[#allocation3]]
    %v34 = vld [vmem:[%s32] sm:$0x1]
    %v35 = vld [vmem:[%s2] sm:$0x1]
    %v37 = vlaneseq
    %v38 = vshrl.u32 %v37, 7
    %v39 = vsub.s32 0, %v38
    %v40 = vrot.slane %v35, %v39
    %41 = vrot.lane.b32.xlu0 %v40, 32
    %v42 = vpop.permute.xlu0 %41
    %vm44 = vcmask 261120
    %v45 = vsel %vm44, %v34, %v42
    %v46 = vld [vmem:[%s4] sm:$0xff]
    %v47 = vld [vmem:[%s4 + $0x8] sm:$0xff]
    %v48 = vld [vmem:[%s4 + $0x10] sm:$0xff]
    %v49 = vld [vmem:[%s4 + $0x18] sm:$0xff]
    %v50 = vld [vmem:[%s4 + $0x20] sm:$0xff]
    %v51 = vld [vmem:[%s4 + $0x28] sm:$0xff]
    %v52 = vld [vmem:[%s4 + $0x30] sm:$0xff]
    %v53 = vld [vmem:[%s4 + $0x38] sm:$0xff]
    %v54 = vld [vmem:[%s4 + $0x40] sm:$0xff]
    %v55 = vld [vmem:[%s4 + $0x48] sm:$0xff]
    %v56 = vld [vmem:[%s4 + $0x50] sm:$0xff]
    %v57 = vld [vmem:[%s4 + $0x58] sm:$0xff]
    %v58 = vld [vmem:[%s4 + $0x60] sm:$0xff]
    %v59 = vld [vmem:[%s4 + $0x68] sm:$0xff]
    %v60 = vld [vmem:[%s4 + $0x70] sm:$0xff]
    %v61 = vld [vmem:[%s4 + $0x78] sm:$0xff]
    %s62 = scalar_lea.vmem %s4, 128
    %v63 = vld [vmem:[%s62] ss:$8 sm:$0x3]
    %v65 = vlaneseq
    %v66 = vshrl.u32 %v65, 7
    %v67 = vsub.s32 0, %v66
    %v68 = vrot.slane %v63, %v67
    %v69 = vlaneseq
    %v70 = vshrl.u32 %v69, 7
    %v71 = vsub.s32 1, %v70
    %v72 = vrot.slane %v63, %v71
    %vm75 = vcmask 523264
    %v77 = vsel %vm75, %v45, 0
    %79 = vmatprep.subr.mxu0 %v47
    %80 = vmatpush1.msra.mxu0 %v46
    %81 = vmatprep.subr.mxu0 %v49
    %82 = vmatpush1.msra.mxu0 %v48
    %83 = vmatprep.subr.mxu0 %v51
    %84 = vmatpush1.msra.mxu0 %v50
    %85 = vmatprep.subr.mxu0 %v53
    %86 = vmatpush1.msra.mxu0 %v52
    %87 = vmatprep.subr.mxu0 %v55
    %88 = vmatpush1.msra.mxu0 %v54
    %89 = vmatprep.subr.mxu0 %v57
    %90 = vmatpush1.msra.mxu0 %v56
    %91 = vmatprep.subr.mxu0 %v59
    %92 = vmatpush1.msra.mxu0 %v58
    %93 = vmatprep.subr.mxu0 %v61
    %94 = vmatpush1.msra.mxu0 %v60
    %95 = vmatprep.subr.mxu0 0.0
    %96 = vmatpush1.msra.mxu0 0.0
    %97 = vmatprep.subr.mxu0 0.0
    %98 = vmatpush1.msra.mxu0 0.0
    %99 = vmatprep.subr.mxu0 0.0
    %100 = vmatpush1.msra.mxu0 0.0
    %101 = vmatprep.subr.mxu0 0.0
    %102 = vmatpush1.msra.mxu0 0.0
    %103 = vmatprep.subr.mxu0 0.0
    %104 = vmatpush1.msra.mxu0 0.0
    %105 = vmatprep.subr.mxu0 0.0
    %106 = vmatpush1.msra.mxu0 0.0
    %107 = vmatprep.subr.mxu0 0.0
    %108 = vmatpush1.msra.mxu0 0.0
    %109 = vmatprep.subr.mxu0 0.0
    %110 = vmatpush1.msra.mxu0 0.0
    %111 = vmatprep.subr.mxu0 0.0
    %112 = vmatpush1.msra.mxu0 0.0
    %113 = vmatprep.subr.mxu0 0.0
    %114 = vmatpush1.msra.mxu0 0.0
    %115 = vmatprep.subr.mxu0 0.0
    %116 = vmatpush1.msra.mxu0 0.0
    %117 = vmatprep.subr.mxu0 0.0
    %118 = vmatpush1.msra.mxu0 0.0
    %119 = vmatprep.subr.mxu0 0.0
    %120 = vmatpush1.msra.mxu0 0.0
    %121 = vmatprep.subr.mxu0 0.0
    %122 = vmatpush1.msra.mxu0 0.0
    %123 = vmatprep.subr.mxu0 0.0
    %124 = vmatpush1.msra.mxu0 0.0
    %125 = vmatprep.subr.mxu0 0.0
    %126 = vmatpush1.msra.mxu0 0.0
    %127 = vmatprep.subr.mxu0 0.0
    %128 = vmatpush1.msra.mxu0 0.0
    %129 = vmatprep.subr.mxu0 0.0
    %130 = vmatpush1.msra.mxu0 0.0
    %131 = vmatprep.subr.mxu0 0.0
    %132 = vmatpush1.msra.mxu0 0.0
    %133 = vmatprep.subr.mxu0 0.0
    %134 = vmatpush1.msra.mxu0 0.0
    %135 = vmatprep.subr.mxu0 0.0
    %136 = vmatpush1.msra.mxu0 0.0
    %137 = vmatprep.subr.mxu0 0.0
    %138 = vmatpush1.msra.mxu0 0.0
    %139 = vmatprep.subr.mxu0 0.0
    %140 = vmatpush1.msra.mxu0 0.0
    %141 = vmatprep.subr.mxu0 0.0
    %142 = vmatpush1.msra.mxu0 0.0
    %143 = vmatprep.mubr.f32.mxu0 0.0
    %144 = vmatmul.mubr.f32.gmra.mrb[0].mxu0 %v77
    %v145 = vpop.f32.mrb[0].mxu0
    %v146 = vadd.f32 %v68, %v145
    %v147 = vpop.f32.mrb[0].mxu0
    %v148 = vadd.f32 %v72, %v147
    %149 = vdwg.mxu0
    %vm150 = vcmask 1040384
    %v151 = vsel %vm150, %v146, -inf
    %152 = vmax.xlane.f32.xlu0 %v151
    %v153 = vpop.xlane.xlu0 %152
    %v154 = vsub.f32 %v146, %v153
    %v155 = vmul.f32 %v154, 1.442695
    %v156 = vpow.pop %v155
    %v157 = vsel %vm150, %v156, 0.0
    %158 = vadd.xlane.f32.xlu0 %v157
    %v159 = vpop.xlane.xlu0 %158
    %v160 = vrcp.pop %v159
    %v161 = vmul.f32 %v156, %v160
    %v162 = vld [vmem:[%s3] sm:$0xff]
    %v163 = vld [vmem:[%s3 + $0x8] sm:$0xff]
    %v164 = vld [vmem:[%s3 + $0x10] sm:$0xff]
    %v165 = vld [vmem:[%s3 + $0x18] sm:$0xff]
    %v166 = vld [vmem:[%s3 + $0x20] sm:$0xff]
    %v167 = vld [vmem:[%s3 + $0x28] sm:$0xff]
    %v168 = vld [vmem:[%s3 + $0x30] sm:$0xff]
    %v169 = vld [vmem:[%s3 + $0x38] sm:$0xff]
    %v170 = vld [vmem:[%s3 + $0x40] sm:$0xff]
    %v171 = vld [vmem:[%s3 + $0x48] sm:$0xff]
    %v172 = vld [vmem:[%s3 + $0x50] sm:$0xff]
    %v173 = vld [vmem:[%s3 + $0x58] sm:$0xff]
    %v174 = vld [vmem:[%s3 + $0x60] sm:$0xff]
    %v175 = vld [vmem:[%s3 + $0x68] sm:$0xff]
    %v176 = vld [vmem:[%s3 + $0x70] sm:$0xff]
    %v177 = vld [vmem:[%s3 + $0x78] sm:$0xff]
    %178 = vmatprep.subr.mxu0 0.0
    %179 = vmatpush1.msra.mxu0 %v162
    %180 = vmatprep.subr.mxu0 0.0
    %181 = vmatpush1.msra.mxu0 %v163
    %182 = vmatprep.subr.mxu0 0.0
    %183 = vmatpush1.msra.mxu0 %v164
    %184 = vmatprep.subr.mxu0 0.0
    %185 = vmatpush1.msra.mxu0 %v165
    %186 = vmatprep.subr.mxu0 0.0
    %187 = vmatpush1.msra.mxu0 %v166
    %188 = vmatprep.subr.mxu0 0.0
    %189 = vmatpush1.msra.mxu0 %v167
    %190 = vmatprep.subr.mxu0 0.0
    %191 = vmatpush1.msra.mxu0 %v168
    %192 = vmatprep.subr.mxu0 0.0
    %193 = vmatpush1.msra.mxu0 %v169
    %194 = vmatprep.subr.mxu0 0.0
    %195 = vmatpush1.msra.mxu0 %v170
    %196 = vmatprep.subr.mxu0 0.0
    %197 = vmatpush1.msra.mxu0 %v171
    %198 = vmatprep.subr.mxu0 0.0
    %199 = vmatpush1.msra.mxu0 %v172
    %200 = vmatprep.subr.mxu0 0.0
    %201 = vmatpush1.msra.mxu0 %v173
    %202 = vmatprep.subr.mxu0 0.0
    %203 = vmatpush1.msra.mxu0 %v174
    %204 = vmatprep.subr.mxu0 0.0
    %205 = vmatpush1.msra.mxu0 %v175
    %206 = vmatprep.subr.mxu0 0.0
    %207 = vmatpush1.msra.mxu0 %v176
    %208 = vmatprep.subr.mxu0 0.0
    %209 = vmatpush1.msra.mxu0 %v177
    %210 = vmatprep.subr.mxu0 0.0
    %211 = vmatpush1.msra.mxu0 0.0
    %212 = vmatprep.subr.mxu0 0.0
    %213 = vmatpush1.msra.mxu0 0.0
    %214 = vmatprep.subr.mxu0 0.0
    %215 = vmatpush1.msra.mxu0 0.0
    %216 = vmatprep.subr.mxu0 0.0
    %217 = vmatpush1.msra.mxu0 0.0
    %218 = vmatprep.subr.mxu0 0.0
    %219 = vmatpush1.msra.mxu0 0.0
    %220 = vmatprep.subr.mxu0 0.0
    %221 = vmatpush1.msra.mxu0 0.0
    %222 = vmatprep.subr.mxu0 0.0
    %223 = vmatpush1.msra.mxu0 0.0
    %224 = vmatprep.subr.mxu0 0.0
    %225 = vmatpush1.msra.mxu0 0.0
    %226 = vmatprep.subr.mxu0 0.0
    %227 = vmatpush1.msra.mxu0 0.0
    %228 = vmatprep.subr.mxu0 0.0
    %229 = vmatpush1.msra.mxu0 0.0
    %230 = vmatprep.subr.mxu0 0.0
    %231 = vmatpush1.msra.mxu0 0.0
    %232 = vmatprep.subr.mxu0 0.0
    %233 = vmatpush1.msra.mxu0 0.0
    %234 = vmatprep.subr.mxu0 0.0
    %235 = vmatpush1.msra.mxu0 0.0
    %236 = vmatprep.subr.mxu0 0.0
    %237 = vmatpush1.msra.mxu0 0.0
    %238 = vmatprep.subr.mxu0 0.0
    %239 = vmatpush1.msra.mxu0 0.0
    %240 = vmatprep.subr.mxu0 0.0
    %241 = vmatpush1.msra.mxu0 0.0
    %242 = vmatprep.mubr.f32.mxu0 0.0
    %243 = vmatmul.mubr.f32.gmra.mrb[0].mxu0 %v161
    %v244 = vpop.f32.mrb[0].mxu0
    %v245 = vadd.f32 0.0, %v244
    %v246 = vpop.f32.mrb[0].mxu0
    %247 = vdwg.mxu0
    %v248 = vld [vmem:[%s4 + $0x90] sm:$0xff]
    %v249 = vld [vmem:[%s4 + $0xa0] sm:$0xff]
    %v250 = vld [vmem:[%s4 + $0xb0] sm:$0xff]
    %v251 = vld [vmem:[%s4 + $0xc0] sm:$0xff]
    %v253 = vsel %vm44, %v245, 0
    %255 = vmatprep.subr.mxu0 0.0
    %256 = vmatpush1.msra.mxu0 %v248
    %257 = vmatprep.subr.mxu0 0.0
    %258 = vmatpush1.msra.mxu0 %v249
    %259 = vmatprep.subr.mxu0 0.0
    %260 = vmatpush1.msra.mxu0 %v250
    %261 = vmatprep.subr.mxu0 0.0
    %262 = vmatpush1.msra.mxu0 %v251
    %263 = vmatprep.subr.mxu0 0.0
    %264 = vmatpush1.msra.mxu0 0.0
    %265 = vmatprep.subr.mxu0 0.0
    %266 = vmatpush1.msra.mxu0 0.0
    %267 = vmatprep.subr.mxu0 0.0
    %268 = vmatpush1.msra.mxu0 0.0
    %269 = vmatprep.subr.mxu0 0.0
    %270 = vmatpush1.msra.mxu0 0.0
    %271 = vmatprep.subr.mxu0 0.0
    %272 = vmatpush1.msra.mxu0 0.0
    %273 = vmatprep.subr.mxu0 0.0
    %274 = vmatpush1.msra.mxu0 0.0
    %275 = vmatprep.subr.mxu0 0.0
    %276 = vmatpush1.msra.mxu0 0.0
    %277 = vmatprep.subr.mxu0 0.0
    %278 = vmatpush1.msra.mxu0 0.0
    %279 = vmatprep.subr.mxu0 0.0
    %280 = vmatpush1.msra.mxu0 0.0
    %281 = vmatprep.subr.mxu0 0.0
    %282 = vmatpush1.msra.mxu0 0.0
    %283 = vmatprep.subr.mxu0 0.0
    %284 = vmatpush1.msra.mxu0 0.0
    %285 = vmatprep.subr.mxu0 0.0
    %286 = vmatpush1.msra.mxu0 0.0
    %287 = vmatprep.subr.mxu0 0.0
    %288 = vmatpush1.msra.mxu0 0.0
    %289 = vmatprep.subr.mxu0 0.0
    %290 = vmatpush1.msra.mxu0 0.0
    %291 = vmatprep.subr.mxu0 0.0
    %292 = vmatpush1.msra.mxu0 0.0
    %293 = vmatprep.subr.mxu0 0.0
    %294 = vmatpush1.msra.mxu0 0.0
    %295 = vmatprep.subr.mxu0 0.0
    %296 = vmatpush1.msra.mxu0 0.0
    %297 = vmatprep.subr.mxu0 0.0
    %298 = vmatpush1.msra.mxu0 0.0
    %299 = vmatprep.subr.mxu0 0.0
    %300 = vmatpush1.msra.mxu0 0.0
    %301 = vmatprep.subr.mxu0 0.0
    %302 = vmatpush1.msra.mxu0 0.0
    %303 = vmatprep.subr.mxu0 0.0
    %304 = vmatpush1.msra.mxu0 0.0
    %305 = vmatprep.subr.mxu0 0.0
    %306 = vmatpush1.msra.mxu0 0.0
    %307 = vmatprep.subr.mxu0 0.0
    %308 = vmatpush1.msra.mxu0 0.0
    %309 = vmatprep.subr.mxu0 0.0
    %310 = vmatpush1.msra.mxu0 0.0
    %311 = vmatprep.subr.mxu0 0.0
    %312 = vmatpush1.msra.mxu0 0.0
    %313 = vmatprep.subr.mxu0 0.0
    %314 = vmatpush1.msra.mxu0 0.0
    %315 = vmatprep.subr.mxu0 0.0
    %316 = vmatpush1.msra.mxu0 0.0
    %317 = vmatprep.subr.mxu0 0.0
    %318 = vmatpush1.msra.mxu0 0.0
    %319 = vmatprep.mubr.f32.mxu0 0.0
    %320 = vmatmul.mubr.f32.gmra.mrb[0].mxu0 %v253
    %v321 = vpop.f32.mrb[0].mxu0
    %v322 = vadd.f32 0.0, %v321
    %v323 = vpop.f32.mrb[0].mxu0
    %324 = vdwg.mxu0
    %v325 = vadd.f32 %v148, %v322
    %v326 = vmax.f32 %v325, 0.0
    %v327 = vld [vmem:[%s4 + $0xd0] ss:$0 sm:$0xff]
    %332 = vrot.lane.b32.xlu0 %v248, 96
    %v333 = vpop.permute.xlu0 %332
    %334 = vrot.lane.b32.xlu0 %v249, 96
    %v335 = vpop.permute.xlu0 %334
    %336 = vrot.lane.b32.xlu0 %v250, 96
    %v337 = vpop.permute.xlu0 %336
    %338 = vrot.lane.b32.xlu0 %v251, 96
    %v339 = vpop.permute.xlu0 %338
    %345 = vrot.lane.b32.xlu0 %v327, 96
    %v346 = vpop.permute.xlu0 %345
    %v349 = vsel %vm44, %v326, 0
    %351 = vmatprep.subr.mxu0 0.0
    %352 = vmatpush1.msra.mxu0 %v333
    %353 = vmatprep.subr.mxu0 0.0
    %354 = vmatpush1.msra.mxu0 %v335
    %355 = vmatprep.subr.mxu0 0.0
    %356 = vmatpush1.msra.mxu0 %v337
    %357 = vmatprep.subr.mxu0 0.0
    %358 = vmatpush1.msra.mxu0 %v339
    %359 = vmatprep.subr.mxu0 0.0
    %360 = vmatpush1.msra.mxu0 0.0
    %361 = vmatprep.subr.mxu0 0.0
    %362 = vmatpush1.msra.mxu0 0.0
    %363 = vmatprep.subr.mxu0 0.0
    %364 = vmatpush1.msra.mxu0 0.0
    %365 = vmatprep.subr.mxu0 0.0
    %366 = vmatpush1.msra.mxu0 0.0
    %367 = vmatprep.subr.mxu0 0.0
    %368 = vmatpush1.msra.mxu0 0.0
    %369 = vmatprep.subr.mxu0 0.0
    %370 = vmatpush1.msra.mxu0 0.0
    %371 = vmatprep.subr.mxu0 0.0
    %372 = vmatpush1.msra.mxu0 0.0
    %373 = vmatprep.subr.mxu0 0.0
    %374 = vmatpush1.msra.mxu0 0.0
    %375 = vmatprep.subr.mxu0 0.0
    %376 = vmatpush1.msra.mxu0 0.0
    %377 = vmatprep.subr.mxu0 0.0
    %378 = vmatpush1.msra.mxu0 0.0
    %379 = vmatprep.subr.mxu0 0.0
    %380 = vmatpush1.msra.mxu0 0.0
    %381 = vmatprep.subr.mxu0 0.0
    %382 = vmatpush1.msra.mxu0 0.0
    %383 = vmatprep.subr.mxu0 0.0
    %384 = vmatpush1.msra.mxu0 0.0
    %385 = vmatprep.subr.mxu0 0.0
    %386 = vmatpush1.msra.mxu0 0.0
    %387 = vmatprep.subr.mxu0 0.0
    %388 = vmatpush1.msra.mxu0 0.0
    %389 = vmatprep.subr.mxu0 0.0
    %390 = vmatpush1.msra.mxu0 0.0
    %391 = vmatprep.subr.mxu0 0.0
    %392 = vmatpush1.msra.mxu0 0.0
    %393 = vmatprep.subr.mxu0 0.0
    %394 = vmatpush1.msra.mxu0 0.0
    %395 = vmatprep.subr.mxu0 0.0
    %396 = vmatpush1.msra.mxu0 0.0
    %397 = vmatprep.subr.mxu0 0.0
    %398 = vmatpush1.msra.mxu0 0.0
    %399 = vmatprep.subr.mxu0 0.0
    %400 = vmatpush1.msra.mxu0 0.0
    %401 = vmatprep.subr.mxu0 0.0
    %402 = vmatpush1.msra.mxu0 0.0
    %403 = vmatprep.subr.mxu0 0.0
    %404 = vmatpush1.msra.mxu0 0.0
    %405 = vmatprep.subr.mxu0 0.0
    %406 = vmatpush1.msra.mxu0 0.0
    %407 = vmatprep.subr.mxu0 0.0
    %408 = vmatpush1.msra.mxu0 0.0
    %409 = vmatprep.subr.mxu0 0.0
    %410 = vmatpush1.msra.mxu0 0.0
    %411 = vmatprep.subr.mxu0 0.0
    %412 = vmatpush1.msra.mxu0 0.0
    %413 = vmatprep.subr.mxu0 0.0
    %414 = vmatpush1.msra.mxu0 0.0
    %415 = vmatprep.mubr.f32.mxu0 0.0
    %416 = vmatmul.mubr.f32.gmra.mrb[0].mxu0 %v349
    %v417 = vpop.f32.mrb[0].mxu0
    %v418 = vadd.f32 %v346, %v417
    %v419 = vpop.f32.mrb[0].mxu0
    %420 = vdwg.mxu0
    %422 = vrot.lane.b32.xlu0 %v148, 96
    %v423 = vpop.permute.xlu0 %422
    %v425 = vadd.f32 %v418, %v423
    %v426 = vxor.u32 %v425, 2147483648
    %v427 = vmul.f32 %v426, 1.442695
    %v428 = vpow.pop %v427
    %v429 = vadd.f32 %v428, 1.0
    %v430 = vrcp.pop %v429
    %v431 = vmul.f32 1.0, %v430
    %432 = vrot.lane.b32.xlu0 %v148, 32
    %v433 = vpop.permute.xlu0 %432
    %v435 = vmul.f32 %v431, %v433
    %437 = vrot.lane.b32.xlu0 %v435, 64
    %v438 = vpop.permute.xlu0 %437
    %v440 = vadd.f32 %v418, %v438
    %v441 = vtanh.pop %v440
    %v442 = vsub.f32 1.0, %v431
    %444 = vrot.lane.b32.xlu0 %v441, 96
    %v445 = vpop.permute.xlu0 %444
    %v447 = vmul.f32 %v442, %v445
    %v448 = vmul.f32 %v431, %v42
    %v449 = vadd.f32 %v447, %v448
    %v450 = vld [vmem:[%s4 + $0x98] sm:$0xff]
    %v451 = vld [vmem:[%s4 + $0xa8] sm:$0xff]
    %v452 = vld [vmem:[%s4 + $0xb8] sm:$0xff]
    %v453 = vld [vmem:[%s4 + $0xc8] sm:$0xff]
    %v454 = vld [vmem:[%s4 + $0xd8] ss:$0 sm:$0xff]
    %456 = vrot.lane.b32.xlu0 %v449, 96
    %v457 = vpop.permute.xlu0 %456
    %v458 = vsel %vm44, %v457, 0
    %460 = vmatprep.subr.mxu0 0.0
    %461 = vmatpush1.msra.mxu0 %v450
    %462 = vmatprep.subr.mxu0 0.0
    %463 = vmatpush1.msra.mxu0 %v451
    %464 = vmatprep.subr.mxu0 0.0
    %465 = vmatpush1.msra.mxu0 %v452
    %466 = vmatprep.subr.mxu0 0.0
    %467 = vmatpush1.msra.mxu0 %v453
    %468 = vmatprep.subr.mxu0 0.0
    %469 = vmatpush1.msra.mxu0 0.0
    %470 = vmatprep.subr.mxu0 0.0
    %471 = vmatpush1.msra.mxu0 0.0
    %472 = vmatprep.subr.mxu0 0.0
    %473 = vmatpush1.msra.mxu0 0.0
    %474 = vmatprep.subr.mxu0 0.0
    %475 = vmatpush1.msra.mxu0 0.0
    %476 = vmatprep.subr.mxu0 0.0
    %477 = vmatpush1.msra.mxu0 0.0
    %478 = vmatprep.subr.mxu0 0.0
    %479 = vmatpush1.msra.mxu0 0.0
    %480 = vmatprep.subr.mxu0 0.0
    %481 = vmatpush1.msra.mxu0 0.0
    %482 = vmatprep.subr.mxu0 0.0
    %483 = vmatpush1.msra.mxu0 0.0
    %484 = vmatprep.subr.mxu0 0.0
    %485 = vmatpush1.msra.mxu0 0.0
    %486 = vmatprep.subr.mxu0 0.0
    %487 = vmatpush1.msra.mxu0 0.0
    %488 = vmatprep.subr.mxu0 0.0
    %489 = vmatpush1.msra.mxu0 0.0
    %490 = vmatprep.subr.mxu0 0.0
    %491 = vmatpush1.msra.mxu0 0.0
    %492 = vmatprep.subr.mxu0 0.0
    %493 = vmatpush1.msra.mxu0 0.0
    %494 = vmatprep.subr.mxu0 0.0
    %495 = vmatpush1.msra.mxu0 0.0
    %496 = vmatprep.subr.mxu0 0.0
    %497 = vmatpush1.msra.mxu0 0.0
    %498 = vmatprep.subr.mxu0 0.0
    %499 = vmatpush1.msra.mxu0 0.0
    %500 = vmatprep.subr.mxu0 0.0
    %501 = vmatpush1.msra.mxu0 0.0
    %502 = vmatprep.subr.mxu0 0.0
    %503 = vmatpush1.msra.mxu0 0.0
    %504 = vmatprep.subr.mxu0 0.0
    %505 = vmatpush1.msra.mxu0 0.0
    %506 = vmatprep.subr.mxu0 0.0
    %507 = vmatpush1.msra.mxu0 0.0
    %508 = vmatprep.subr.mxu0 0.0
    %509 = vmatpush1.msra.mxu0 0.0
    %510 = vmatprep.subr.mxu0 0.0
    %511 = vmatpush1.msra.mxu0 0.0
    %512 = vmatprep.subr.mxu0 0.0
    %513 = vmatpush1.msra.mxu0 0.0
    %514 = vmatprep.subr.mxu0 0.0
    %515 = vmatpush1.msra.mxu0 0.0
    %516 = vmatprep.subr.mxu0 0.0
    %517 = vmatpush1.msra.mxu0 0.0
    %518 = vmatprep.subr.mxu0 0.0
    %519 = vmatpush1.msra.mxu0 0.0
    %520 = vmatprep.subr.mxu0 0.0
    %521 = vmatpush1.msra.mxu0 0.0
    %522 = vmatprep.subr.mxu0 0.0
    %523 = vmatpush1.msra.mxu0 0.0
    %524 = vmatprep.mubr.f32.mxu0 0.0
    %525 = vmatmul.mubr.f32.gmra.mrb[0].mxu0 %v458
    %v526 = vpop.f32.mrb[0].mxu0
    %v527 = vadd.f32 %v454, %v526
    %v528 = vpop.f32.mrb[0].mxu0
    %529 = vdwg.mxu0
    %vm530 = vcmask 516096
    %v531 = vsel %vm530, %v527, -inf
    %532 = vmax.xlane.f32.xlu0 %v531
    %v533 = vpop.xlane.xlu0 %532
    %v534 = vsub.f32 %v527, %v533
    %v535 = vmul.f32 %v534, 1.442695
    %v536 = vpow.pop %v535
    %v537 = vsel %vm530, %v536, 0.0
    %538 = vadd.xlane.f32.xlu0 %v537
    %v539 = vpop.xlane.xlu0 %538
    %v540 = vlog2.pop %v539
    %v541 = vmul.f32 %v540, 0.6931472
    %v542 = vadd.f32 %v541, %v533
    %v543 = vsub.f32 %v527, %v542
    %544 = vrot.lane.b32.xlu0 %v449, 32
    %v545 = vpop.permute.xlu0 %544
    %v547 = vsel %vm75, %v543, %v545
    %vm548 = vcmask 785408
    %v549 = vsel %vm548, %v547, 0.0
    %v552 = vcombine.low %v549, %v161
    %v554 = vunpack.c.l.s4 1966171168
    %v555 = vunpack.c.0.s8 %v554
    %v556 = vlaneseq
    %v557 = vshrl.u32 %v556, 7
    %v558 = vsub.s32 %v555, %v557
    %v559 = vrot.slane %v552, %v558
    %v561 = vunpack.c.l.s4 1966171168
    %v562 = vunpack.c.0.s8 %v561
    %v563 = vlaneseq
    %v564 = vshrl.u32 %v563, 7
    %v565 = vsub.s32 %v562, %v564
    %v566 = vrot.slane %v559, %v565
    %v568 = vlaneseq
    %vm569 = vcmp.ge.s32.totalorder %v568, 0
    %vm570 = vcmp.lt.s32.totalorder %v568, 256
    %vm571 = vmand %vm569, %vm570
    %572 = vst.msk [vmem:[#allocation4] sm:$0x3] %vm571, %v566
    // Predicated region
    $region18: #{tpu_custom_call.1} parent=1 // pred_check
      _
    $region19: #{tpu_custom_call.1} parent=1 // pred_check_branch
      %574 = sbr.rel (0) target = $region21
    $region20: #{tpu_custom_call.1} parent=1 // pred_region
      %s576 = ssub.s32 32, 32
      %577 = vsyncadd [#allocation5], %s576
      %s579 = sshll.u32 [#allocation4], 4
      %s580 = int_to_ptr.vmem [resolvable:$true] %s579
      %582 = dma.vmem_to_hbm [thread:$0]  %s580, 32, %s5, [#allocation5]
    $region21: #{tpu_custom_call.1} parent=1 // pred_fallthru
      _
    // Predicated region
    $region22: #{tpu_custom_call.1} parent=1 // pred_check
      _
    $region23: #{tpu_custom_call.1} parent=1 // pred_check_branch
      %584 = sbr.rel (0) target = $region25
    $region24: #{tpu_custom_call.1} parent=1 // pred_region
      %585 = dma.done [#allocation5], 32
    $region25: #{tpu_custom_call.1} parent=1 // pred_fallthru
      _
    %586 = vsyncpa [#allocation5], 1

</llo_original>
